<compile_context>
chip_gen: v5e
topology: v5e:2x2
jax: 0.10.0
libtpu: 0.0.40
codegen_flags: <defaults>
</compile_context>

<pallas_src>
import jax
import jax.numpy as jnp
from jax.experimental import pallas as pl
from jax.experimental.pallas import tpu as pltpu


HIDDEN = 256


def _round_up(x, m):
    return ((x + m - 1) // m) * m


def _head_kernel(x_ref, w1_ref, b1_ref, w2_ref, b2_ref, o_ref, acc_ref):
    # x_ref : (TILE_N, TILE_K) bf16      w1_ref: (TILE_K, 256) bf16
    # b1_ref: (1, 256) f32               w2_ref: (1, 256) f32 (w2 transposed)
    # b2_ref: (1,) f32 in SMEM           o_ref : (TILE_N, 1) f32
    # acc_ref: (TILE_N, 256) f32 scratch accumulator
    k = pl.program_id(1)

    @pl.when(k == 0)
    def _():
        acc_ref[...] = jnp.zeros_like(acc_ref)

    # Layer 1 partial product on the MXU, f32 accumulation.
    acc_ref[...] += jnp.dot(x_ref[...], w1_ref[...],
                            preferred_element_type=jnp.float32)

    @pl.when(k == pl.num_programs(1) - 1)
    def _():
        h = jnp.maximum(acc_ref[...] + b1_ref[...], 0.0)          # bias + ReLU (VPU)
        # TODO(synk): dropout is identity in eval mode; training-mode dropout
        #             (pltpu.prng_* + mask) is not implemented here.
        # Layer 2: (256 -> 1) as VPU multiply + lane reduction instead of a
        # width-1 MXU matmul.
        out = jnp.sum(h * w2_ref[...], axis=-1, keepdims=True) + b2_ref[0]
        o_ref[...] = out.astype(o_ref.dtype)


def prediction_head(x_nchw, w1, b1, w2, b2):
    """PredictionHead forward (eval mode).

    x_nchw: (N, C, H, W) float32
    w1: (F, 256)  b1: (1, 256)  w2: (256, 1)  b2: (1, 1)
    Returns squeezed logits like the PyTorch module (shape (N,), 0-d when N==1).
    """
    n = x_nchw.shape[0]
    x2d = x_nchw.reshape(n, -1)                  # nn.Flatten (row-major)
    f = x2d.shape[1]
    hidden = w1.shape[1]

    # ---- tile sizing -------------------------------------------------------
    tile_n = 128 if n >= 128 else _round_up(n, 16)
    n_pad = _round_up(n, tile_n)

    if f <= 512:
        f_pad = _round_up(f, 128)
        tile_k = f_pad                            # single K step
    else:
        tile_k = 512                              # keeps w1 blocks small (v7x-safe)
        f_pad = _round_up(f, tile_k)

    grid = (n_pad // tile_n, f_pad // tile_k)

    # ---- operand prep (bf16 for the two big DMA'd operands) ----------------
    x_p = jnp.pad(x2d.astype(jnp.float32),
                  ((0, n_pad - n), (0, f_pad - f))).astype(jnp.bfloat16)
    w1_p = jnp.pad(w1.astype(jnp.float32),
                   ((0, f_pad - f), (0, 0))).astype(jnp.bfloat16)
    b1_v = b1.reshape(1, hidden).astype(jnp.float32)
    w2_t = w2.reshape(hidden, 1).T.astype(jnp.float32)     # (1, hidden)
    b2_s = b2.reshape(1).astype(jnp.float32)               # scalar -> SMEM

    # ---- VMEM budget / cost hint -------------------------------------------
    vmem_needed = (2 * (tile_n * tile_k * 2 + tile_k * hidden * 2)  # 2x-buffered bf16 blocks
                   + tile_n * hidden * 4                            # accumulator
                   + 2 * hidden * 4 + 2 * tile_n * 4)               # b1, w2^T, output
    vmem_limit = int(min(max(4 * vmem_needed, 4 << 20), 32 << 20))

    cost = pl.CostEstimate(
        flops=2 * n_pad * f_pad * hidden + 2 * n_pad * hidden,
        transcendentals=0,
        bytes_accessed=int(x_p.size * 2 + w1_p.size * 2
                           + 2 * hidden * 4 + n_pad * 4 + 4),
    )

    out = pl.pallas_call(
        _head_kernel,
        out_shape=jax.ShapeDtypeStruct((n_pad, 1), jnp.float32),
        grid=grid,
        in_specs=[
            pl.BlockSpec((tile_n, tile_k), lambda i, k: (i, k)),   # x tile
            pl.BlockSpec((tile_k, hidden), lambda i, k: (k, 0)),   # w1 tile
            pl.BlockSpec((1, hidden), lambda i, k: (0, 0)),        # b1 (resident)
            pl.BlockSpec((1, hidden), lambda i, k: (0, 0)),        # w2^T (resident)
            pl.BlockSpec(memory_space=pltpu.MemorySpace.SMEM),     # b2 scalar
        ],
        out_specs=pl.BlockSpec((tile_n, 1), lambda i, k: (i, 0)),
        scratch_shapes=[pltpu.VMEM((tile_n, hidden), jnp.float32)],
        compiler_params=pltpu.CompilerParams(
            dimension_semantics=("parallel", "arbitrary"),
            vmem_limit_bytes=vmem_limit,
        ),
        cost_estimate=cost,
    )(x_p, w1_p, b1_v, w2_t, b2_s)

    return jnp.squeeze(out[:n])                  # matches x.squeeze()


if __name__ == "__main__":
    key = jax.random.PRNGKey(0)
    k_x, k_w1, k_b1, k_w2, k_b2 = jax.random.split(key, 5)

    # Small shapes consistent with the module's forward:
    # input (2, 4, 16, 16) -> flatten -> F = 4*16*16 = 1024
    N, C, H, W = 2, 4, 16, 16
    F = C * H * W

    x = jax.random.normal(k_x, (N, C, H, W), dtype=jnp.float32)

    # Deterministic parameter init (PyTorch-style uniform bounds).
    lim1 = 1.0 / jnp.sqrt(F)
    w1 = jax.random.uniform(k_w1, (F, HIDDEN), jnp.float32, -lim1, lim1)
    b1 = jax.random.uniform(k_b1, (1, HIDDEN), jnp.float32, -lim1, lim1)
    lim2 = 1.0 / jnp.sqrt(HIDDEN)
    w2 = jax.random.uniform(k_w2, (HIDDEN, 1), jnp.float32, -lim2, lim2)
    b2 = jax.random.uniform(k_b2, (1, 1), jnp.float32, -lim2, lim2)

    y = jax.block_until_ready(prediction_head(x, w1, b1, w2, b2))

    # Pure-JAX reference using the same bf16 rounding of x / w1 as the kernel.
    x2d = x.reshape(N, -1)
    xb = x2d.astype(jnp.bfloat16).astype(jnp.float32)
    w1b = w1.astype(jnp.bfloat16).astype(jnp.float32)
    h = jnp.maximum(
        jnp.dot(xb, w1b, precision=jax.lax.Precision.HIGHEST) + b1, 0.0)
    ref = jnp.squeeze(h @ w2 + b2)

    assert y.shape == (N,), y.shape
    assert jnp.allclose(y, ref, atol=1e-2, rtol=1e-2), (y, ref)

    print("KERNEL_OK")
</pallas_src>

<mosaic_0001>
module attributes {stable_mosaic.version = 11 : i64} {
  func.func @_head_kernel(%arg0: i32, %arg1: i32, %arg2: memref<16x512xbf16, #tpu.memory_space<vmem>>, %arg3: memref<512x256xbf16, #tpu.memory_space<vmem>>, %arg4: memref<1x256xf32, #tpu.memory_space<vmem>>, %arg5: memref<1x256xf32, #tpu.memory_space<vmem>>, %arg6: memref<1xf32, #tpu.memory_space<smem>>, %arg7: memref<16x1xf32, #tpu.memory_space<vmem>>, %arg8: memref<16x256xf32, #tpu.memory_space<vmem>>) attributes {dimension_semantics = [#tpu.dimension_semantics<parallel>, #tpu.dimension_semantics<arbitrary>], iteration_bounds = array<i64: 1, 2>, scalar_prefetch = 0 : i64, scratch_operands = 1 : i64, tpu.core_type = #tpu.core_type<tc>, window_params = [{transform_indices = @transform_0, window_bounds = array<i64: 16, 512>}, {transform_indices = @transform_1, window_bounds = array<i64: 512, 256>}, {pipeline_mode = #tpu.pipeline_mode<synchronous>, transform_indices = @transform_2, window_bounds = array<i64: 1, 256>}, {pipeline_mode = #tpu.pipeline_mode<synchronous>, transform_indices = @transform_3, window_bounds = array<i64: 1, 256>}, {transform_indices = @transform_4, window_bounds = array<i64: 1>}, {transform_indices = @transform_5, window_bounds = array<i64: 16, 1>}]} {
    %c0_i32 = arith.constant 0 : i32
    %0 = arith.cmpi eq, %arg1, %c0_i32 : i32
    %1 = arith.extui %0 : i1 to i32
    %c0_i32_0 = arith.constant 0 : i32
    %2 = arith.cmpi ne, %1, %c0_i32_0 : i32
    scf.if %2 {
      %cst_9 = arith.constant 0.000000e+00 : f32
      %12 = vector.broadcast %cst_9 : f32 to vector<16x256xf32>
      %c0_10 = arith.constant 0 : index
      %c0_11 = arith.constant 0 : index
      %13 = vector.load %arg8[%c0_10, %c0_11] : memref<16x256xf32, #tpu.memory_space<vmem>>, vector<16x256xf32>
      tpu.vector_store %arg8[%c0_10, %c0_11], %12 {strides = array<i32>} : memref<16x256xf32, #tpu.memory_space<vmem>>, vector<16x256xf32>,
    } else {
    }
    %c0 = arith.constant 0 : index
    %c0_1 = arith.constant 0 : index
    %3 = vector.load %arg8[%c0, %c0_1] : memref<16x256xf32, #tpu.memory_space<vmem>>, vector<16x256xf32>
    %c0_2 = arith.constant 0 : index
    %c0_3 = arith.constant 0 : index
    %4 = vector.load %arg2[%c0_2, %c0_3] : memref<16x512xbf16, #tpu.memory_space<vmem>>, vector<16x512xbf16>
    %c0_4 = arith.constant 0 : index
    %c0_5 = arith.constant 0 : index
    %5 = vector.load %arg3[%c0_4, %c0_5] : memref<512x256xbf16, #tpu.memory_space<vmem>>, vector<512x256xbf16>
    %cst = arith.constant dense<0.000000e+00> : vector<16x256xf32>
    %6 = tpu.matmul %4, %5, %cst {dimension_numbers = #tpu.dot_dimension_numbers<[1], [0], [0], [1], [0, 0, 1, 1], [], []>} : vector<16x512xbf16>, vector<512x256xbf16>, vector<16x256xf32> -> vector<16x256xf32>
    %7 = arith.addf %3, %6 : vector<16x256xf32>
    %c0_6 = arith.constant 0 : index
    %c0_7 = arith.constant 0 : index
    %8 = vector.load %arg8[%c0_6, %c0_7] : memref<16x256xf32, #tpu.memory_space<vmem>>, vector<16x256xf32>
    tpu.vector_store %arg8[%c0_6, %c0_7], %7 {strides = array<i32>} : memref<16x256xf32, #tpu.memory_space<vmem>>, vector<16x256xf32>,
    %c1_i32 = arith.constant 1 : i32
    %9 = arith.cmpi eq, %arg1, %c1_i32 : i32
    %10 = arith.extui %9 : i1 to i32
    %c0_i32_8 = arith.constant 0 : i32
    %11 = arith.cmpi ne, %10, %c0_i32_8 : i32
    scf.if %11 {
      %c0_9 = arith.constant 0 : index
      %c0_10 = arith.constant 0 : index
      %12 = vector.load %arg8[%c0_9, %c0_10] : memref<16x256xf32, #tpu.memory_space<vmem>>, vector<16x256xf32>
      %c0_11 = arith.constant 0 : index
      %c0_12 = arith.constant 0 : index
      %13 = vector.load %arg4[%c0_11, %c0_12] : memref<1x256xf32, #tpu.memory_space<vmem>>, vector<1x256xf32>
      %14 = vector.broadcast %13 : vector<1x256xf32> to vector<16x256xf32>
      %15 = arith.addf %12, %14 : vector<16x256xf32>
      %cst_13 = arith.constant 0.000000e+00 : f32
      %16 = vector.broadcast %cst_13 : f32 to vector<16x256xf32>
      %17 = arith.maximumf %15, %16 : vector<16x256xf32>
      %c0_14 = arith.constant 0 : index
      %c0_15 = arith.constant 0 : index
      %18 = vector.load %arg5[%c0_14, %c0_15] : memref<1x256xf32, #tpu.memory_space<vmem>>, vector<1x256xf32>
      %19 = vector.broadcast %18 : vector<1x256xf32> to vector<16x256xf32>
      %20 = arith.mulf %17, %19 : vector<16x256xf32>
      %cst_16 = arith.constant dense<0.000000e+00> : vector<16xf32>
      %21 = vector.multi_reduction <add>, %20, %cst_16 [1] : vector<16x256xf32> to vector<16xf32>
      %22 = vector.shape_cast %21 : vector<16xf32> to vector<16x1xf32>
      %c0_17 = arith.constant 0 : index
      %23 = memref.load %arg6[%c0_17] : memref<1xf32, #tpu.memory_space<smem>>
      %24 = vector.broadcast %23 : f32 to vector<16x1xf32>
      %25 = arith.addf %22, %24 : vector<16x1xf32>
      %c0_18 = arith.constant 0 : index
      %c0_19 = arith.constant 0 : index
      %26 = vector.load %arg7[%c0_18, %c0_19] : memref<16x1xf32, #tpu.memory_space<vmem>>, vector<16x1xf32>
      tpu.vector_store %arg7[%c0_18, %c0_19], %25 {strides = array<i32>} : memref<16x1xf32, #tpu.memory_space<vmem>>, vector<16x1xf32>,
    } else {
    }
    return
  }
  func.func @transform_0(%arg0: i32, %arg1: i32) -> (i32, i32) {
    %c0_i32 = arith.constant 0 : i32
    return %arg0, %arg1 : i32, i32
  }
  func.func @transform_1(%arg0: i32, %arg1: i32) -> (i32, i32) {
    %c0_i32 = arith.constant 0 : i32
    %c0_i32_0 = arith.constant 0 : i32
    return %arg1, %c0_i32 : i32, i32
  }
  func.func @transform_2(%arg0: i32, %arg1: i32) -> (i32, i32) {
    %c0_i32 = arith.constant 0 : i32
    %c0_i32_0 = arith.constant 0 : i32
    %c0_i32_1 = arith.constant 0 : i32
    return %c0_i32, %c0_i32_0 : i32, i32
  }
  func.func @transform_3(%arg0: i32, %arg1: i32) -> (i32, i32) {
    %c0_i32 = arith.constant 0 : i32
    %c0_i32_0 = arith.constant 0 : i32
    %c0_i32_1 = arith.constant 0 : i32
    return %c0_i32, %c0_i32_0 : i32, i32
  }
  func.func @transform_4(%arg0: i32, %arg1: i32) -> i32 {
    %c0_i32 = arith.constant 0 : i32
    %c0_i32_0 = arith.constant 0 : i32
    return %c0_i32 : i32
  }
  func.func @transform_5(%arg0: i32, %arg1: i32) -> (i32, i32) {
    %c0_i32 = arith.constant 0 : i32
    %c0_i32_0 = arith.constant 0 : i32
    return %arg0, %c0_i32 : i32, i32
  }
}

</mosaic_0001>

<llo_original>
// kernel: tpu_custom_call.1
$region0: #{tpu_custom_call.1}
  #allocation0 [shape = 'u32[]', space=smem, size = 0x4, offset = 0x4, fixed_abs, tag = 'smem constant byte address 0x4 - core index']
  #allocation1 [shape = 'u32[72,128]{1,0:T(1,128)}', space=vmem, size = 0x9000, scoped, tag = 'internal scratch']
  #allocation2 [shape = 'f32[16,256]{1,0:T(8,128)}', space=vmem, size = 0x4000, scoped, tag = 'scratch operand']
  #allocation3 [shape = 'f32[1]{0:T(128)S(6)}', space=smem, size = 0x200, scoped, tag = 'scoped memory for tpu_custom_call.1']
  %s0 = inlined_call_operand.hbm [shape: bf16[16,1024], index: 0, kind: input, shape index: {}]
  %s1 = inlined_call_operand.hbm [shape: bf16[1024,256], index: 1, kind: input, shape index: {}]
  %s2 = inlined_call_operand.vmem [shape: f32[1,256], index: 2, kind: input, shape index: {}]
  %s3 = inlined_call_operand.vmem [shape: f32[1,256], index: 3, kind: input, shape index: {}]
  %s4 = inlined_call_operand.<no memory space> [shape: f32[1], index: 4, kind: input, shape index: {}]
  %s5 = inlined_call_operand.vmem [shape: f32[16,1], index: 5, kind: output, shape index: {}]
  %s6 = sld [smem:[#allocation0]]
  $region69: #{tpu_custom_call.1} parent=0
    _
  %s8 = ssub.s32 1, %s6
  %s9 = scalar_select 0, %s8, %s6
  %10 = sst [smem:[#allocation3]] %s4
  $region1: #{tpu_custom_call.1} parent=0
    #allocation4 [shape = 'u8[32768]{0}', space=vmem, size = 0x8000, scoped, tag = 'input window, operand 0']
    #allocation5 [shape = 's32[2]{0}', space=sflag, size = 0x8, scoped, tag = 'scoped memory for tpu_custom_call.1']
    #allocation6 [shape = 'u8[524288]{0}', space=vmem, size = 0x80000, scoped, tag = 'input window, operand 1']
    #allocation7 [shape = 's32[2]{0}', space=sflag, size = 0x8, scoped, tag = 'scoped memory for tpu_custom_call.1']
    %11 = vsyncpa [#allocation5], 0
    %s12 = scalar_lea.sflag [#allocation5], 1
    %13 = vsyncpa %s12, 0
    %14 = vsyncpa [#allocation7], 0
    %s15 = scalar_lea.sflag [#allocation7], 1
    %16 = vsyncpa %s15, 0
    loop: start=0, step=1, limit=4
    $region2: #{tpu_custom_call.1} parent=1 // loop_pre_header
      _
    $region3: #{tpu_custom_call.1} parent=1 // loop_header
      %s18 = sphi 0, %s22
      %p19 = scmp.ge.s32.totalorder %s18, 4
      %s25 = sphi 0, %s37
      %s26 = sphi 0, %s33
      %s27 = sphi 0, %s25
      %s28 = sphi 0, %s26
      %s29 = sphi 0, %s27
      %s30 = sphi 0, %s28
      %s42 = sphi 0, %s44
      %s45 = sphi 0, %s42
      %s46 = sphi 0, %s45
      %s62 = sphi 0, %s46
      %s68 = sphi 0, %s70
      %s71 = sphi 0, %s68
      %s72 = sphi 0, %s71
      %s88 = sphi 0, %s72
      %s92 = sphi 0, %s92
      %s94 = sphi 0, %s92
      %s95 = sphi 0, %s94
      %s109 = sphi 0, %s95
      %s113 = sphi 0, %s113
      %s115 = sphi 0, %s113
      %s116 = sphi 0, %s115
      %s130 = sphi 0, %s116
      %s134 = sphi 0, %s134
      %s136 = sphi 0, %s134
      %s137 = sphi 0, %s136
      %s151 = sphi 0, %s137
      %s157 = sphi 0, %s159
      %s160 = sphi 0, %s157
      %s161 = sphi 0, %s160
      %s177 = sphi 0, %s161
    $region4: #{tpu_custom_call.1} parent=1 // loop_header_branch
      %21 = sbr.rel (%p19) target = $region8
    $region5: #{tpu_custom_call.1} parent=1 // loop_body
      %s23 = ssub.s32 %s18, 1
      %s24 = ssub.s32 %s18, 2
      %s31 = sadd.s32 1, %s26
      %p32 = scmp.ge.s32.totalorder %s31, 2
      %s33 = scalar_select %p32, 0, %s31
      %s34 = sadd.s32 1, %s25
      %s35 = scalar_select %p32, %s34, %s25
      %p36 = scmp.ge.s32.totalorder %s35, 1
      %s37 = scalar_select %p36, 0, %s35
      %s38 = ssub.s32 %s25, %s37
      %s39 = ssub.s32 %s26, %s33
      %s40 = sor.u32 %s38, %s39
      %p41 = scmp.eq.s32.totalorder %s40, 0
      %s43 = sadd.s32 %s42, 1
      %s44 = scalar_select %p41, %s42, %s43
      %p47 = pneg %p41
      %p48 = scmp.eq.s32.totalorder %s18, 1
      %p49 = por %p47, %p48
      %p50 = scmp.ne.s32.totalorder %s42, %s45
      %p51 = scmp.eq.s32.totalorder %s18, 0
      %p52 = por %p50, %p51
      %p53 = scmp.ne.s32.totalorder %s42, %s45
      %p54 = scmp.eq.s32.totalorder %s23, 1
      %p55 = por %p53, %p54
      %p56 = scmp.ne.s32.totalorder %s45, %s46
      %p57 = scmp.eq.s32.totalorder %s23, 0
      %p58 = por %p56, %p57
      %p59 = scmp.ne.s32.totalorder %s45, %s46
      %p60 = scmp.eq.s32.totalorder %s24, 1
      %p61 = por %p59, %p60
      %p63 = scmp.ne.s32.totalorder %s46, %s62
      %p64 = scmp.eq.s32.totalorder %s24, 0
      %p65 = por %p63, %p64
      %s66 = ssub.s32 %s26, %s33
      %p67 = scmp.eq.s32.totalorder %s66, 0
      %s69 = sadd.s32 %s68, 1
      %s70 = scalar_select %p67, %s68, %s69
      %p73 = pneg %p67
      %p74 = scmp.eq.s32.totalorder %s18, 1
      %p75 = por %p73, %p74
      %p76 = scmp.ne.s32.totalorder %s68, %s71
      %p77 = scmp.eq.s32.totalorder %s18, 0
      %p78 = por %p76, %p77
      %p79 = scmp.ne.s32.totalorder %s68, %s71
      %p80 = scmp.eq.s32.totalorder %s23, 1
      %p81 = por %p79, %p80
      %p82 = scmp.ne.s32.totalorder %s71, %s72
      %p83 = scmp.eq.s32.totalorder %s23, 0
      %p84 = por %p82, %p83
      %p85 = scmp.ne.s32.totalorder %s71, %s72
      %p86 = scmp.eq.s32.totalorder %s24, 1
      %p87 = por %p85, %p86
      %p89 = scmp.ne.s32.totalorder %s72, %s88
      %p90 = scmp.eq.s32.totalorder %s24, 0
      %p91 = por %p89, %p90
      %s93 = sadd.s32 %s92, 1
      %p96 = scmp.eq.s32.totalorder %s18, 1
      %p97 = scmp.ne.s32.totalorder %s92, %s94
      %p98 = scmp.eq.s32.totalorder %s18, 0
      %p99 = por %p97, %p98
      %p100 = scmp.ne.s32.totalorder %s92, %s94
      %p101 = scmp.eq.s32.totalorder %s23, 1
      %p102 = por %p100, %p101
      %p103 = scmp.ne.s32.totalorder %s94, %s95
      %p104 = scmp.eq.s32.totalorder %s23, 0
      %p105 = por %p103, %p104
      %p106 = scmp.ne.s32.totalorder %s94, %s95
      %p107 = scmp.eq.s32.totalorder %s24, 1
      %p108 = por %p106, %p107
      %p110 = scmp.ne.s32.totalorder %s95, %s109
      %p111 = scmp.eq.s32.totalorder %s24, 0
      %p112 = por %p110, %p111
      %s114 = sadd.s32 %s113, 1
      %p117 = scmp.eq.s32.totalorder %s18, 1
      %p118 = scmp.ne.s32.totalorder %s113, %s115
      %p119 = scmp.eq.s32.totalorder %s18, 0
      %p120 = por %p118, %p119
      %p121 = scmp.ne.s32.totalorder %s113, %s115
      %p122 = scmp.eq.s32.totalorder %s23, 1
      %p123 = por %p121, %p122
      %p124 = scmp.ne.s32.totalorder %s115, %s116
      %p125 = scmp.eq.s32.totalorder %s23, 0
      %p126 = por %p124, %p125
      %p127 = scmp.ne.s32.totalorder %s115, %s116
      %p128 = scmp.eq.s32.totalorder %s24, 1
      %p129 = por %p127, %p128
      %p131 = scmp.ne.s32.totalorder %s116, %s130
      %p132 = scmp.eq.s32.totalorder %s24, 0
      %p133 = por %p131, %p132
      %s135 = sadd.s32 %s134, 1
      %p138 = scmp.eq.s32.totalorder %s18, 1
      %p139 = scmp.ne.s32.totalorder %s134, %s136
      %p140 = scmp.eq.s32.totalorder %s18, 0
      %p141 = por %p139, %p140
      %p142 = scmp.ne.s32.totalorder %s134, %s136
      %p143 = scmp.eq.s32.totalorder %s23, 1
      %p144 = por %p142, %p143
      %p145 = scmp.ne.s32.totalorder %s136, %s137
      %p146 = scmp.eq.s32.totalorder %s23, 0
      %p147 = por %p145, %p146
      %p148 = scmp.ne.s32.totalorder %s136, %s137
      %p149 = scmp.eq.s32.totalorder %s24, 1
      %p150 = por %p148, %p149
      %p152 = scmp.ne.s32.totalorder %s137, %s151
      %p153 = scmp.eq.s32.totalorder %s24, 0
      %p154 = por %p152, %p153
      %s155 = ssub.s32 %s25, %s37
      %p156 = scmp.eq.s32.totalorder %s155, 0
      %s158 = sadd.s32 %s157, 1
      %s159 = scalar_select %p156, %s157, %s158
      %p162 = pneg %p156
      %p163 = scmp.eq.s32.totalorder %s18, 1
      %p164 = por %p162, %p163
      %p165 = scmp.ne.s32.totalorder %s157, %s160
      %p166 = scmp.eq.s32.totalorder %s18, 0
      %p167 = por %p165, %p166
      %p168 = scmp.ne.s32.totalorder %s157, %s160
      %p169 = scmp.eq.s32.totalorder %s23, 1
      %p170 = por %p168, %p169
      %p171 = scmp.ne.s32.totalorder %s160, %s161
      %p172 = scmp.eq.s32.totalorder %s23, 0
      %p173 = por %p171, %p172
      %p174 = scmp.ne.s32.totalorder %s160, %s161
      %p175 = scmp.eq.s32.totalorder %s24, 1
      %p176 = por %p174, %p175
      %p178 = scmp.ne.s32.totalorder %s161, %s177
      %p179 = scmp.eq.s32.totalorder %s24, 0
      %p180 = por %p178, %p179
      %p181 = scmp.le.s32.totalorder 1, %s18
      %p182 = scmp.lt.s32.totalorder %s18, 3
      %p183 = pnand %p181, %p182
      %p184 = pneg %p183
      // Predicated region
      $region9: #{tpu_custom_call.1} parent=5 // pred_check
        _
      $region10: #{tpu_custom_call.1} parent=5 // pred_check_branch
        %186 = sbr.rel (%p183) target = $region12
      $region11: #{tpu_custom_call.1} parent=5 // pred_region
        %s187 = ssub.s32 %s18, 1
        // Predicated region
        $region13: #{tpu_custom_call.1} parent=11 // pred_check
          %p188 = pneg %p105
        $region14: #{tpu_custom_call.1} parent=11 // pred_check_branch
          %190 = sbr.rel (%p188) target = $region16
        $region15: #{tpu_custom_call.1} parent=11 // pred_region
          _
        $region16: #{tpu_custom_call.1} parent=11 // pred_fallthru
          _
        // Predicated region
        $region17: #{tpu_custom_call.1} parent=11 // pred_check
          %p191 = pneg %p126
        $region18: #{tpu_custom_call.1} parent=11 // pred_check_branch
          %193 = sbr.rel (%p191) target = $region20
        $region19: #{tpu_custom_call.1} parent=11 // pred_region
          _
        $region20: #{tpu_custom_call.1} parent=11 // pred_fallthru
          _
        // Predicated region
        $region21: #{tpu_custom_call.1} parent=11 // pred_check
          %p194 = pneg %p147
        $region22: #{tpu_custom_call.1} parent=11 // pred_check_branch
          %196 = sbr.rel (%p194) target = $region24
        $region23: #{tpu_custom_call.1} parent=11 // pred_region
          _
        $region24: #{tpu_custom_call.1} parent=11 // pred_fallthru
          _
      $region12: #{tpu_custom_call.1} parent=5 // pred_fallthru
        _
      %p197 = scmp.lt.s32.totalorder %s18, 2
      // Predicated region
      $region25: #{tpu_custom_call.1} parent=5 // pred_check
        %p198 = pneg %p197
      $region26: #{tpu_custom_call.1} parent=5 // pred_check_branch
        %200 = sbr.rel (%p198) target = $region28
      $region27: #{tpu_custom_call.1} parent=5 // pred_region
        // Predicated region
        $region29: #{tpu_custom_call.1} parent=27 // pred_check
          %p201 = pneg %p52
        $region30: #{tpu_custom_call.1} parent=27 // pred_check_branch
          %203 = sbr.rel (%p201) target = $region32
        $region31: #{tpu_custom_call.1} parent=27 // pred_region
          %s204 = sand.u32 %s42, 1
          %s205 = scalar_lea.sflag [#allocation5], %s204
          %s206 = sand.u32 %s42, 1
          %s207 = smul.addr %s206, 32
          %s208 = scalar_lea.vmem [#allocation4], %s207
          %s209 = smul.u32 2, %s25
          %s210 = smul.u32 4, %s26
          %212 = vsyncadd %s205, 0
          %s213 = smul.addr %s209, 8
          %s214 = sadd.s32 %s210, %s213
          %s215 = smul.addr %s214, 4
          %s216 = scalar_lea.hbm %s0, %s215
          %s217 = sshll.u32 %s216, 4
          %s218 = int_to_ptr.hbm [resolvable:$true] %s217
          %s219 = sshll.u32 %s208, 4
          %s220 = int_to_ptr.vmem [resolvable:$true] %s219
          %225 = dma.hbm_to_vmem [thread:$0]  %s218, 512, %s220, %s205, 512, 256, 16
        $region32: #{tpu_custom_call.1} parent=27 // pred_fallthru
          _
        // Predicated region
        $region33: #{tpu_custom_call.1} parent=27 // pred_check
          %p226 = pneg %p78
        $region34: #{tpu_custom_call.1} parent=27 // pred_check_branch
          %228 = sbr.rel (%p226) target = $region36
        $region35: #{tpu_custom_call.1} parent=27 // pred_region
          %s229 = sand.u32 %s68, 1
          %s230 = scalar_lea.sflag [#allocation7], %s229
          %s231 = sand.u32 %s68, 1
          %s232 = smul.addr %s231, 512
          %s233 = scalar_lea.vmem [#allocation6], %s232
          %s234 = smul.u32 64, %s26
          %236 = vsyncadd %s230, 0
          %s237 = smul.addr %s234, 2
          %s238 = smul.addr %s237, 4
          %s239 = scalar_lea.hbm %s1, %s238
          %s240 = sshll.u32 %s239, 4
          %s241 = int_to_ptr.hbm [resolvable:$true] %s240
          %s242 = sshll.u32 %s233, 4
          %s243 = int_to_ptr.vmem [resolvable:$true] %s242
          %248 = dma.hbm_to_vmem [thread:$0]  %s241, 8192, %s243, %s230, 128, 128, 8
        $region36: #{tpu_custom_call.1} parent=27 // pred_fallthru
          _
      $region28: #{tpu_custom_call.1} parent=5 // pred_fallthru
        _
      %p249 = scmp.le.s32.totalorder 1, %s18
      %p250 = scmp.lt.s32.totalorder %s18, 3
      %p251 = pnand %p249, %p250
      %p252 = pneg %p251
      // Predicated region
      $region37: #{tpu_custom_call.1} parent=5 // pred_check
        _
      $region38: #{tpu_custom_call.1} parent=5 // pred_check_branch
        %254 = sbr.rel (%p251) target = $region40
      $region39: #{tpu_custom_call.1} parent=5 // pred_region
        %s255 = ssub.s32 %s18, 1
        %s256 = sand.u32 %s45, 1
        %s257 = scalar_lea.sflag [#allocation5], %s256
        %s258 = sand.u32 %s45, 1
        %s259 = smul.addr %s258, 32
        %s260 = scalar_lea.vmem [#allocation4], %s259
        // Predicated region
        $region41: #{tpu_custom_call.1} parent=39 // pred_check
          %p261 = pneg %p58
        $region42: #{tpu_custom_call.1} parent=39 // pred_check_branch
          %263 = sbr.rel (%p261) target = $region44
        $region43: #{tpu_custom_call.1} parent=39 // pred_region
          %265 = dma.done %s257, 512
        $region44: #{tpu_custom_call.1} parent=39 // pred_fallthru
          _
        %s266 = sand.u32 %s71, 1
        %s267 = scalar_lea.sflag [#allocation7], %s266
        %s268 = sand.u32 %s71, 1
        %s269 = smul.addr %s268, 512
        %s270 = scalar_lea.vmem [#allocation6], %s269
        // Predicated region
        $region45: #{tpu_custom_call.1} parent=39 // pred_check
          %p271 = pneg %p84
        $region46: #{tpu_custom_call.1} parent=39 // pred_check_branch
          %273 = sbr.rel (%p271) target = $region48
        $region47: #{tpu_custom_call.1} parent=39 // pred_region
          %275 = dma.done %s267, 8192
        $region48: #{tpu_custom_call.1} parent=39 // pred_fallthru
          _
        %s276 = sand.u32 %s45, 1
        %s277 = scalar_lea.sflag [#allocation5], %s276
        %s278 = sand.u32 %s45, 1
        %s279 = smul.addr %s278, 32
        %s280 = scalar_lea.vmem [#allocation4], %s279
        %p281 = pneg %p58
        %p282 = pneg %p55
        %s283 = sand.u32 %s71, 1
        %s284 = scalar_lea.sflag [#allocation7], %s283
        %s285 = sand.u32 %s71, 1
        %s286 = smul.addr %s285, 512
        %s287 = scalar_lea.vmem [#allocation6], %s286
        %p288 = pneg %p84
        %p289 = pneg %p81
        %p290 = pneg %p105
        %p291 = pneg %p102
        %p292 = pneg %p126
        %p293 = pneg %p123
        %p294 = pneg %p147
        %p295 = pneg %p144
        %p296 = pneg %p173
        %p297 = pneg %p170
        %s298 = smul.u32 2, %s27
        %p299 = scmp.lt.s32.totalorder %s298, 1
        %s300 = scalar_select %p299, %s298, 1
        %s301 = smul.addr %s300, 8
        %s302 = scalar_lea.vmem %s5, %s301
        %s303 = smul.u32 2, %s27
        %s304 = smul.u32 4, %s28
        %s305 = smul.u32 64, %s28
        %s306 = smul.u32 2, %s27
        %p307 = scmp.lt.s32.totalorder %s306, 1
        %s308 = scalar_select %p307, %s306, 1
        %s309 = smul.addr %s308, 8
        %s310 = scalar_lea.vmem %s5, %s309
        %s311 = smul.u32 2, %s27
        %p312 = scmp.eq.s32.totalorder %s28, 0
        // Predicated region
        $region49: #{tpu_custom_call.1} parent=39 // pred_check
          %p313 = pneg %p312
        $region50: #{tpu_custom_call.1} parent=39 // pred_check_branch
          %315 = sbr.rel (%p313) target = $region52
        $region51: #{tpu_custom_call.1} parent=39 // pred_region
          %316 = vst [vmem:[#allocation2] sm:$0xff] 0.0
          %317 = vst [vmem:[#allocation2 + $0x8] sm:$0xff] 0.0
          %318 = vst [vmem:[#allocation2 + $0x10] sm:$0xff] 0.0
          %319 = vst [vmem:[#allocation2 + $0x18] sm:$0xff] 0.0
        $region52: #{tpu_custom_call.1} parent=39 // pred_fallthru
          _
        %v320 = vld [vmem:[#allocation2] sm:$0xff]
        %v321 = vld [vmem:[#allocation2 + $0x8] sm:$0xff]
        %v322 = vld [vmem:[#allocation2 + $0x10] sm:$0xff]
        %v323 = vld [vmem:[#allocation2 + $0x18] sm:$0xff]
        %v324 = vld [vmem:[%s260] sm:$0xff]
        %v325 = vld [vmem:[%s260 + $0x8] sm:$0xff]
        %v326 = vld [vmem:[%s260 + $0x10] sm:$0xff]
        %v327 = vld [vmem:[%s260 + $0x18] sm:$0xff]
        %v328 = vld [vmem:[%s270] sm:$0xff]
        %v329 = vld [vmem:[%s270 + $0x8] sm:$0xff]
        %v330 = vld [vmem:[%s270 + $0x10] sm:$0xff]
        %v331 = vld [vmem:[%s270 + $0x18] sm:$0xff]
        %v332 = vld [vmem:[%s270 + $0x20] sm:$0xff]
        %v333 = vld [vmem:[%s270 + $0x28] sm:$0xff]
        %v334 = vld [vmem:[%s270 + $0x30] sm:$0xff]
        %v335 = vld [vmem:[%s270 + $0x38] sm:$0xff]
        %v336 = vld [vmem:[%s270 + $0x40] sm:$0xff]
        %v337 = vld [vmem:[%s270 + $0x48] sm:$0xff]
        %v338 = vld [vmem:[%s270 + $0x50] sm:$0xff]
        %v339 = vld [vmem:[%s270 + $0x58] sm:$0xff]
        %v340 = vld [vmem:[%s270 + $0x60] sm:$0xff]
        %v341 = vld [vmem:[%s270 + $0x68] sm:$0xff]
        %v342 = vld [vmem:[%s270 + $0x70] sm:$0xff]
        %v343 = vld [vmem:[%s270 + $0x78] sm:$0xff]
        %v344 = vld [vmem:[%s270 + $0x80] sm:$0xff]
        %v345 = vld [vmem:[%s270 + $0x88] sm:$0xff]
        %v346 = vld [vmem:[%s270 + $0x90] sm:$0xff]
        %v347 = vld [vmem:[%s270 + $0x98] sm:$0xff]
        %v348 = vld [vmem:[%s270 + $0xa0] sm:$0xff]
        %v349 = vld [vmem:[%s270 + $0xa8] sm:$0xff]
        %v350 = vld [vmem:[%s270 + $0xb0] sm:$0xff]
        %v351 = vld [vmem:[%s270 + $0xb8] sm:$0xff]
        %v352 = vld [vmem:[%s270 + $0xc0] sm:$0xff]
        %v353 = vld [vmem:[%s270 + $0xc8] sm:$0xff]
        %v354 = vld [vmem:[%s270 + $0xd0] sm:$0xff]
        %v355 = vld [vmem:[%s270 + $0xd8] sm:$0xff]
        %v356 = vld [vmem:[%s270 + $0xe0] sm:$0xff]
        %v357 = vld [vmem:[%s270 + $0xe8] sm:$0xff]
        %v358 = vld [vmem:[%s270 + $0xf0] sm:$0xff]
        %v359 = vld [vmem:[%s270 + $0xf8] sm:$0xff]
        %v360 = vld [vmem:[%s270 + $0x100] sm:$0xff]
        %v361 = vld [vmem:[%s270 + $0x108] sm:$0xff]
        %v362 = vld [vmem:[%s270 + $0x110] sm:$0xff]
        %v363 = vld [vmem:[%s270 + $0x118] sm:$0xff]
        %v364 = vld [vmem:[%s270 + $0x120] sm:$0xff]
        %v365 = vld [vmem:[%s270 + $0x128] sm:$0xff]
        %v366 = vld [vmem:[%s270 + $0x130] sm:$0xff]
        %v367 = vld [vmem:[%s270 + $0x138] sm:$0xff]
        %v368 = vld [vmem:[%s270 + $0x140] sm:$0xff]
        %v369 = vld [vmem:[%s270 + $0x148] sm:$0xff]
        %v370 = vld [vmem:[%s270 + $0x150] sm:$0xff]
        %v371 = vld [vmem:[%s270 + $0x158] sm:$0xff]
        %v372 = vld [vmem:[%s270 + $0x160] sm:$0xff]
        %v373 = vld [vmem:[%s270 + $0x168] sm:$0xff]
        %v374 = vld [vmem:[%s270 + $0x170] sm:$0xff]
        %v375 = vld [vmem:[%s270 + $0x178] sm:$0xff]
        %v376 = vld [vmem:[%s270 + $0x180] sm:$0xff]
        %v377 = vld [vmem:[%s270 + $0x188] sm:$0xff]
        %v378 = vld [vmem:[%s270 + $0x190] sm:$0xff]
        %v379 = vld [vmem:[%s270 + $0x198] sm:$0xff]
        %v380 = vld [vmem:[%s270 + $0x1a0] sm:$0xff]
        %v381 = vld [vmem:[%s270 + $0x1a8] sm:$0xff]
        %v382 = vld [vmem:[%s270 + $0x1b0] sm:$0xff]
        %v383 = vld [vmem:[%s270 + $0x1b8] sm:$0xff]
        %v384 = vld [vmem:[%s270 + $0x1c0] sm:$0xff]
        %v385 = vld [vmem:[%s270 + $0x1c8] sm:$0xff]
        %v386 = vld [vmem:[%s270 + $0x1d0] sm:$0xff]
        %v387 = vld [vmem:[%s270 + $0x1d8] sm:$0xff]
        %v388 = vld [vmem:[%s270 + $0x1e0] sm:$0xff]
        %v389 = vld [vmem:[%s270 + $0x1e8] sm:$0xff]
        %v390 = vld [vmem:[%s270 + $0x1f0] sm:$0xff]
        %v391 = vld [vmem:[%s270 + $0x1f8] sm:$0xff]
        %v396 = vunpack.c.l.b16 %v324
        %v397 = vunpack.c.h.b16 %v324
        %v398 = vunpack.c.l.b16 %v325
        %v399 = vunpack.c.h.b16 %v325
        %v400 = vunpack.c.l.b16 %v326
        %v401 = vunpack.c.h.b16 %v326
        %v402 = vunpack.c.l.b16 %v327
        %v403 = vunpack.c.h.b16 %v327
        %v404 = vpack.c.b16 %v400, %v396
        %v405 = vpack.c.b16 %v401, %v397
        %v406 = vpack.c.b16 %v402, %v398
        %v407 = vpack.c.b16 %v403, %v399
        %v476 = vunpack.c.l.b16 %v328
        %v477 = vunpack.c.h.b16 %v328
        %v478 = vunpack.c.l.b16 %v329
        %v479 = vunpack.c.h.b16 %v329
        %v480 = vunpack.c.l.b16 %v330
        %v481 = vunpack.c.h.b16 %v330
        %v482 = vunpack.c.l.b16 %v331
        %v483 = vunpack.c.h.b16 %v331
        %v484 = vunpack.c.l.b16 %v332
        %v485 = vunpack.c.h.b16 %v332
        %v486 = vunpack.c.l.b16 %v333
        %v487 = vunpack.c.h.b16 %v333
        %v488 = vunpack.c.l.b16 %v334
        %v489 = vunpack.c.h.b16 %v334
        %v490 = vunpack.c.l.b16 %v335
        %v491 = vunpack.c.h.b16 %v335
        %v492 = vunpack.c.l.b16 %v336
        %v493 = vunpack.c.h.b16 %v336
        %v494 = vunpack.c.l.b16 %v337
        %v495 = vunpack.c.h.b16 %v337
        %v496 = vunpack.c.l.b16 %v338
        %v497 = vunpack.c.h.b16 %v338
        %v498 = vunpack.c.l.b16 %v339
        %v499 = vunpack.c.h.b16 %v339
        %v500 = vunpack.c.l.b16 %v340
        %v501 = vunpack.c.h.b16 %v340
        %v502 = vunpack.c.l.b16 %v341
        %v503 = vunpack.c.h.b16 %v341
        %v504 = vunpack.c.l.b16 %v342
        %v505 = vunpack.c.h.b16 %v342
        %v506 = vunpack.c.l.b16 %v343
        %v507 = vunpack.c.h.b16 %v343
        %v508 = vunpack.c.l.b16 %v344
        %v509 = vunpack.c.h.b16 %v344
        %v510 = vunpack.c.l.b16 %v345
        %v511 = vunpack.c.h.b16 %v345
        %v512 = vunpack.c.l.b16 %v346
        %v513 = vunpack.c.h.b16 %v346
        %v514 = vunpack.c.l.b16 %v347
        %v515 = vunpack.c.h.b16 %v347
        %v516 = vunpack.c.l.b16 %v348
        %v517 = vunpack.c.h.b16 %v348
        %v518 = vunpack.c.l.b16 %v349
        %v519 = vunpack.c.h.b16 %v349
        %v520 = vunpack.c.l.b16 %v350
        %v521 = vunpack.c.h.b16 %v350
        %v522 = vunpack.c.l.b16 %v351
        %v523 = vunpack.c.h.b16 %v351
        %v524 = vunpack.c.l.b16 %v352
        %v525 = vunpack.c.h.b16 %v352
        %v526 = vunpack.c.l.b16 %v353
        %v527 = vunpack.c.h.b16 %v353
        %v528 = vunpack.c.l.b16 %v354
        %v529 = vunpack.c.h.b16 %v354
        %v530 = vunpack.c.l.b16 %v355
        %v531 = vunpack.c.h.b16 %v355
        %v532 = vunpack.c.l.b16 %v356
        %v533 = vunpack.c.h.b16 %v356
        %v534 = vunpack.c.l.b16 %v357
        %v535 = vunpack.c.h.b16 %v357
        %v536 = vunpack.c.l.b16 %v358
        %v537 = vunpack.c.h.b16 %v358
        %v538 = vunpack.c.l.b16 %v359
        %v539 = vunpack.c.h.b16 %v359
        %v540 = vunpack.c.l.b16 %v360
        %v541 = vunpack.c.h.b16 %v360
        %v542 = vunpack.c.l.b16 %v361
        %v543 = vunpack.c.h.b16 %v361
        %v544 = vunpack.c.l.b16 %v362
        %v545 = vunpack.c.h.b16 %v362
        %v546 = vunpack.c.l.b16 %v363
        %v547 = vunpack.c.h.b16 %v363
        %v548 = vunpack.c.l.b16 %v364
        %v549 = vunpack.c.h.b16 %v364
        %v550 = vunpack.c.l.b16 %v365
        %v551 = vunpack.c.h.b16 %v365
        %v552 = vunpack.c.l.b16 %v366
        %v553 = vunpack.c.h.b16 %v366
        %v554 = vunpack.c.l.b16 %v367
        %v555 = vunpack.c.h.b16 %v367
        %v556 = vunpack.c.l.b16 %v368
        %v557 = vunpack.c.h.b16 %v368
        %v558 = vunpack.c.l.b16 %v369
        %v559 = vunpack.c.h.b16 %v369
        %v560 = vunpack.c.l.b16 %v370
        %v561 = vunpack.c.h.b16 %v370
        %v562 = vunpack.c.l.b16 %v371
        %v563 = vunpack.c.h.b16 %v371
        %v564 = vunpack.c.l.b16 %v372
        %v565 = vunpack.c.h.b16 %v372
        %v566 = vunpack.c.l.b16 %v373
        %v567 = vunpack.c.h.b16 %v373
        %v568 = vunpack.c.l.b16 %v374
        %v569 = vunpack.c.h.b16 %v374
        %v570 = vunpack.c.l.b16 %v375
        %v571 = vunpack.c.h.b16 %v375
        %v572 = vunpack.c.l.b16 %v376
        %v573 = vunpack.c.h.b16 %v376
        %v574 = vunpack.c.l.b16 %v377
        %v575 = vunpack.c.h.b16 %v377
        %v576 = vunpack.c.l.b16 %v378
        %v577 = vunpack.c.h.b16 %v378
        %v578 = vunpack.c.l.b16 %v379
        %v579 = vunpack.c.h.b16 %v379
        %v580 = vunpack.c.l.b16 %v380
        %v581 = vunpack.c.h.b16 %v380
        %v582 = vunpack.c.l.b16 %v381
        %v583 = vunpack.c.h.b16 %v381
        %v584 = vunpack.c.l.b16 %v382
        %v585 = vunpack.c.h.b16 %v382
        %v586 = vunpack.c.l.b16 %v383
        %v587 = vunpack.c.h.b16 %v383
        %v588 = vunpack.c.l.b16 %v384
        %v589 = vunpack.c.h.b16 %v384
        %v590 = vunpack.c.l.b16 %v385
        %v591 = vunpack.c.h.b16 %v385
        %v592 = vunpack.c.l.b16 %v386
        %v593 = vunpack.c.h.b16 %v386
        %v594 = vunpack.c.l.b16 %v387
        %v595 = vunpack.c.h.b16 %v387
        %v596 = vunpack.c.l.b16 %v388
        %v597 = vunpack.c.h.b16 %v388
        %v598 = vunpack.c.l.b16 %v389
        %v599 = vunpack.c.h.b16 %v389
        %v600 = vunpack.c.l.b16 %v390
        %v601 = vunpack.c.h.b16 %v390
        %v602 = vunpack.c.l.b16 %v391
        %v603 = vunpack.c.h.b16 %v391
        %v604 = vpack.c.b16 %v478, %v476
        %v605 = vpack.c.b16 %v479, %v477
        %v606 = vpack.c.b16 %v482, %v480
        %v607 = vpack.c.b16 %v483, %v481
        %v608 = vpack.c.b16 %v486, %v484
        %v609 = vpack.c.b16 %v487, %v485
        %v610 = vpack.c.b16 %v490, %v488
        %v611 = vpack.c.b16 %v491, %v489
        %v612 = vpack.c.b16 %v494, %v492
        %v613 = vpack.c.b16 %v495, %v493
        %v614 = vpack.c.b16 %v498, %v496
        %v615 = vpack.c.b16 %v499, %v497
        %v616 = vpack.c.b16 %v502, %v500
        %v617 = vpack.c.b16 %v503, %v501
        %v618 = vpack.c.b16 %v506, %v504
        %v619 = vpack.c.b16 %v507, %v505
        %v620 = vpack.c.b16 %v510, %v508
        %v621 = vpack.c.b16 %v511, %v509
        %v622 = vpack.c.b16 %v514, %v512
        %v623 = vpack.c.b16 %v515, %v513
        %v624 = vpack.c.b16 %v518, %v516
        %v625 = vpack.c.b16 %v519, %v517
        %v626 = vpack.c.b16 %v522, %v520
        %v627 = vpack.c.b16 %v523, %v521
        %v628 = vpack.c.b16 %v526, %v524
        %v629 = vpack.c.b16 %v527, %v525
        %v630 = vpack.c.b16 %v530, %v528
        %v631 = vpack.c.b16 %v531, %v529
        %v632 = vpack.c.b16 %v534, %v532
        %v633 = vpack.c.b16 %v535, %v533
        %v634 = vpack.c.b16 %v538, %v536
        %v635 = vpack.c.b16 %v539, %v537
        %v636 = vpack.c.b16 %v542, %v540
        %v637 = vpack.c.b16 %v543, %v541
        %v638 = vpack.c.b16 %v546, %v544
        %v639 = vpack.c.b16 %v547, %v545
        %v640 = vpack.c.b16 %v550, %v548
        %v641 = vpack.c.b16 %v551, %v549
        %v642 = vpack.c.b16 %v554, %v552
        %v643 = vpack.c.b16 %v555, %v553
        %v644 = vpack.c.b16 %v558, %v556
        %v645 = vpack.c.b16 %v559, %v557
        %v646 = vpack.c.b16 %v562, %v560
        %v647 = vpack.c.b16 %v563, %v561
        %v648 = vpack.c.b16 %v566, %v564
        %v649 = vpack.c.b16 %v567, %v565
        %v650 = vpack.c.b16 %v570, %v568
        %v651 = vpack.c.b16 %v571, %v569
        %v652 = vpack.c.b16 %v574, %v572
        %v653 = vpack.c.b16 %v575, %v573
        %v654 = vpack.c.b16 %v578, %v576
        %v655 = vpack.c.b16 %v579, %v577
        %v656 = vpack.c.b16 %v582, %v580
        %v657 = vpack.c.b16 %v583, %v581
        %v658 = vpack.c.b16 %v586, %v584
        %v659 = vpack.c.b16 %v587, %v585
        %v660 = vpack.c.b16 %v590, %v588
        %v661 = vpack.c.b16 %v591, %v589
        %v662 = vpack.c.b16 %v594, %v592
        %v663 = vpack.c.b16 %v595, %v593
        %v664 = vpack.c.b16 %v598, %v596
        %v665 = vpack.c.b16 %v599, %v597
        %v666 = vpack.c.b16 %v602, %v600
        %v667 = vpack.c.b16 %v603, %v601
        %732 = vmatpush.bf16.msra.mxu0 %v618
        %733 = vmatpush.bf16.msra.mxu0 %v616
        %734 = vmatpush.bf16.msra.mxu0 %v614
        %735 = vmatpush.bf16.msra.mxu0 %v612
        %736 = vmatpush.bf16.msra.mxu0 %v610
        %737 = vmatpush.bf16.msra.mxu0 %v608
        %738 = vmatpush.bf16.msra.mxu0 %v606
        %739 = vmatpush.bf16.msra.mxu0 %v604
        %740 = vmatmul.bf16.gmra.mxu0 %v404
        %v741 = vpop.f32.mrf.mxu0
        %v742 = vadd.f32 0.0, %v741
        %v743 = vpop.f32.mrf.mxu0
        %v744 = vadd.f32 0.0, %v743
        %745 = vdwg.mxu0
        %746 = vmatpush.bf16.msra.mxu0 %v634
        %747 = vmatpush.bf16.msra.mxu0 %v632
        %748 = vmatpush.bf16.msra.mxu0 %v630
        %749 = vmatpush.bf16.msra.mxu0 %v628
        %750 = vmatpush.bf16.msra.mxu0 %v626
        %751 = vmatpush.bf16.msra.mxu0 %v624
        %752 = vmatpush.bf16.msra.mxu0 %v622
        %753 = vmatpush.bf16.msra.mxu0 %v620
        %754 = vmatmul.bf16.gmra.mxu0 %v405
        %v755 = vpop.f32.mrf.mxu0
        %v756 = vadd.f32 %v742, %v755
        %v757 = vpop.f32.mrf.mxu0
        %v758 = vadd.f32 %v744, %v757
        %759 = vdwg.mxu0
        %760 = vmatpush.bf16.msra.mxu0 %v650
        %761 = vmatpush.bf16.msra.mxu0 %v648
        %762 = vmatpush.bf16.msra.mxu0 %v646
        %763 = vmatpush.bf16.msra.mxu0 %v644
        %764 = vmatpush.bf16.msra.mxu0 %v642
        %765 = vmatpush.bf16.msra.mxu0 %v640
        %766 = vmatpush.bf16.msra.mxu0 %v638
        %767 = vmatpush.bf16.msra.mxu0 %v636
        %768 = vmatmul.bf16.gmra.mxu0 %v406
        %v769 = vpop.f32.mrf.mxu0
        %v770 = vadd.f32 %v756, %v769
        %v771 = vpop.f32.mrf.mxu0
        %v772 = vadd.f32 %v758, %v771
        %773 = vdwg.mxu0
        %774 = vmatpush.bf16.msra.mxu0 %v666
        %775 = vmatpush.bf16.msra.mxu0 %v664
        %776 = vmatpush.bf16.msra.mxu0 %v662
        %777 = vmatpush.bf16.msra.mxu0 %v660
        %778 = vmatpush.bf16.msra.mxu0 %v658
        %779 = vmatpush.bf16.msra.mxu0 %v656
        %780 = vmatpush.bf16.msra.mxu0 %v654
        %781 = vmatpush.bf16.msra.mxu0 %v652
        %782 = vmatmul.bf16.gmra.mxu0 %v407
        %v783 = vpop.f32.mrf.mxu0
        %v784 = vadd.f32 %v770, %v783
        %v785 = vpop.f32.mrf.mxu0
        %v786 = vadd.f32 %v772, %v785
        %787 = vdwg.mxu0
        %788 = vmatpush.bf16.msra.mxu0 %v619
        %789 = vmatpush.bf16.msra.mxu0 %v617
        %790 = vmatpush.bf16.msra.mxu0 %v615
        %791 = vmatpush.bf16.msra.mxu0 %v613
        %792 = vmatpush.bf16.msra.mxu0 %v611
        %793 = vmatpush.bf16.msra.mxu0 %v609
        %794 = vmatpush.bf16.msra.mxu0 %v607
        %795 = vmatpush.bf16.msra.mxu0 %v605
        %796 = vmatmul.bf16.gmra.mxu0 %v404
        %v797 = vpop.f32.mrf.mxu0
        %v798 = vadd.f32 0.0, %v797
        %v799 = vpop.f32.mrf.mxu0
        %v800 = vadd.f32 0.0, %v799
        %801 = vdwg.mxu0
        %802 = vmatpush.bf16.msra.mxu0 %v635
        %803 = vmatpush.bf16.msra.mxu0 %v633
        %804 = vmatpush.bf16.msra.mxu0 %v631
        %805 = vmatpush.bf16.msra.mxu0 %v629
        %806 = vmatpush.bf16.msra.mxu0 %v627
        %807 = vmatpush.bf16.msra.mxu0 %v625
        %808 = vmatpush.bf16.msra.mxu0 %v623
        %809 = vmatpush.bf16.msra.mxu0 %v621
        %810 = vmatmul.bf16.gmra.mxu0 %v405
        %v811 = vpop.f32.mrf.mxu0
        %v812 = vadd.f32 %v798, %v811
        %v813 = vpop.f32.mrf.mxu0
        %v814 = vadd.f32 %v800, %v813
        %815 = vdwg.mxu0
        %816 = vmatpush.bf16.msra.mxu0 %v651
        %817 = vmatpush.bf16.msra.mxu0 %v649
        %818 = vmatpush.bf16.msra.mxu0 %v647
        %819 = vmatpush.bf16.msra.mxu0 %v645
        %820 = vmatpush.bf16.msra.mxu0 %v643
        %821 = vmatpush.bf16.msra.mxu0 %v641
        %822 = vmatpush.bf16.msra.mxu0 %v639
        %823 = vmatpush.bf16.msra.mxu0 %v637
        %824 = vmatmul.bf16.gmra.mxu0 %v406
        %v825 = vpop.f32.mrf.mxu0
        %v826 = vadd.f32 %v812, %v825
        %v827 = vpop.f32.mrf.mxu0
        %v828 = vadd.f32 %v814, %v827
        %829 = vdwg.mxu0
        %830 = vmatpush.bf16.msra.mxu0 %v667
        %831 = vmatpush.bf16.msra.mxu0 %v665
        %832 = vmatpush.bf16.msra.mxu0 %v663
        %833 = vmatpush.bf16.msra.mxu0 %v661
        %834 = vmatpush.bf16.msra.mxu0 %v659
        %835 = vmatpush.bf16.msra.mxu0 %v657
        %836 = vmatpush.bf16.msra.mxu0 %v655
        %837 = vmatpush.bf16.msra.mxu0 %v653
        %838 = vmatmul.bf16.gmra.mxu0 %v407
        %v839 = vpop.f32.mrf.mxu0
        %v840 = vadd.f32 %v826, %v839
        %v841 = vpop.f32.mrf.mxu0
        %v842 = vadd.f32 %v828, %v841
        %843 = vdwg.mxu0
        %v844 = vadd.f32 %v320, %v784
        %v845 = vadd.f32 %v321, %v840
        %v846 = vadd.f32 %v322, %v786
        %v847 = vadd.f32 %v323, %v842
        %848 = vst [vmem:[#allocation2] sm:$0xff] %v844
        %849 = vst [vmem:[#allocation2 + $0x8] sm:$0xff] %v845
        %850 = vst [vmem:[#allocation2 + $0x10] sm:$0xff] %v846
        %851 = vst [vmem:[#allocation2 + $0x18] sm:$0xff] %v847
        %p852 = scmp.eq.s32.totalorder %s28, 1
        // Predicated region
        $region53: #{tpu_custom_call.1} parent=39 // pred_check
          %p853 = pneg %p852
        $region54: #{tpu_custom_call.1} parent=39 // pred_check_branch
          %855 = sbr.rel (%p853) target = $region56
        $region55: #{tpu_custom_call.1} parent=39 // pred_region
          %v856 = vld [vmem:[#allocation2] sm:$0xff]
          %v857 = vld [vmem:[#allocation2 + $0x8] sm:$0xff]
          %v858 = vld [vmem:[#allocation2 + $0x10] sm:$0xff]
          %v859 = vld [vmem:[#allocation2 + $0x18] sm:$0xff]
          %v860 = vld [vmem:[%s2] sm:$0x3]
          %v862 = vperm.slane %v860, 0
          %v863 = vperm.slane %v860, 1
          %v866 = vadd.f32 %v856, %v862
          %v867 = vadd.f32 %v857, %v863
          %v868 = vadd.f32 %v858, %v862
          %v869 = vadd.f32 %v859, %v863
          %v870 = vmax.f32 %v866, 0.0
          %v871 = vmax.f32 %v867, 0.0
          %v872 = vmax.f32 %v868, 0.0
          %v873 = vmax.f32 %v869, 0.0
          %v874 = vld [vmem:[%s3] sm:$0x3]
          %v876 = vperm.slane %v874, 0
          %v877 = vperm.slane %v874, 1
          %v880 = vmul.f32 %v870, %v876
          %v881 = vmul.f32 %v871, %v877
          %v882 = vmul.f32 %v872, %v876
          %v883 = vmul.f32 %v873, %v877
          %v884 = vadd.f32 %v880, %v881
          %885 = vadd.xlane.f32.xlu0 %v884
          %v886 = vpop.xlane.xlu0 %885
          %v887 = vadd.f32 %v882, %v883
          %888 = vadd.xlane.f32.xlu0 %v887
          %v889 = vpop.xlane.xlu0 %888
          %s890 = sld [smem:[#allocation3]]
          %v891 = vstv %s890
          %v892 = vadd.f32 %v886, %v891
          %v893 = vadd.f32 %v889, %v891
          %vm894 = vcmask 7168
          %895 = vst.msk [vmem:[%s310] sm:$0xff] %vm894, %v892
          %896 = vst.msk [vmem:[%s310 + $0x8] sm:$0xff] %vm894, %v893
        $region56: #{tpu_custom_call.1} parent=39 // pred_fallthru
          _
        %s897 = smul.u32 2, %s27
        %p898 = scmp.lt.s32.totalorder %s897, 1
        %s899 = scalar_select %p898, %s897, 1
        %s900 = smul.addr %s899, 8
        %s901 = scalar_lea.vmem %s5, %s900
        // Predicated region
        $region57: #{tpu_custom_call.1} parent=39 // pred_check
          %p902 = pneg %p170
        $region58: #{tpu_custom_call.1} parent=39 // pred_check_branch
          %904 = sbr.rel (%p902) target = $region60
        $region59: #{tpu_custom_call.1} parent=39 // pred_region
          %s905 = smul.u32 2, %s27
        $region60: #{tpu_custom_call.1} parent=39 // pred_fallthru
          _
        // Predicated region
        $region61: #{tpu_custom_call.1} parent=39 // pred_check
          %p906 = pneg %p170
        $region62: #{tpu_custom_call.1} parent=39 // pred_check_branch
          %908 = sbr.rel (%p906) target = $region64
        $region63: #{tpu_custom_call.1} parent=39 // pred_region
          %s909 = smul.u32 2, %s27
          %p910 = scmp.lt.s32.totalorder %s909, 1
          %s911 = scalar_select %p910, %s909, 1
          %s912 = smul.addr %s911, 8
          %s913 = scalar_lea.vmem %s5, %s912
        $region64: #{tpu_custom_call.1} parent=39 // pred_fallthru
          _
      $region40: #{tpu_custom_call.1} parent=5 // pred_fallthru
        _
      %p914 = scmp.le.s32.totalorder 2, %s18
      // Predicated region
      $region65: #{tpu_custom_call.1} parent=5 // pred_check
        %p915 = pneg %p914
      $region66: #{tpu_custom_call.1} parent=5 // pred_check_branch
        %917 = sbr.rel (%p915) target = $region68
      $region67: #{tpu_custom_call.1} parent=5 // pred_region
        %s918 = ssub.s32 %s18, 2
      $region68: #{tpu_custom_call.1} parent=5 // pred_fallthru
        _
    $region6: #{tpu_custom_call.1} parent=1 // loop_footer
      %s22 = sadd.s32 1, %s18
    $region7: #{tpu_custom_call.1} parent=1 // loop_footer_branch
      %17 = sbr.rel target = $region3
    $region8: #{tpu_custom_call.1} parent=1 // loop_exit
      _
    %919 = vsyncpa [#allocation5], 1
    %s920 = scalar_lea.sflag [#allocation5], 1
    %921 = vsyncpa %s920, 1
    %922 = vsyncpa [#allocation7], 1
    %s923 = scalar_lea.sflag [#allocation7], 1
    %924 = vsyncpa %s923, 1

</llo_original>
